<compile_context>
chip_gen: v7x
topology: tpu7x:2x2x1
jax: 0.10.0
libtpu: 0.0.40
codegen_flags: <defaults>
</compile_context>

<pallas_src>
import jax
import jax.numpy as jnp
from jax.experimental import pallas as pl
from jax.experimental.pallas import tpu as pltpu

EMBED = 8
HEADS = 2
HEAD_DIM = EMBED // HEADS


def _mha_kernel(x1_ref, x2_ref, wb_ref, out_ref, attn_ref):
    """Single-invocation MHA: all batches, all heads, one kernel step.

    x1_ref  : (Lq, N*E)   queries, sequence-major (free reshape of (Lq, N, E))
    x2_ref  : (Lk, N*E)   keys/values, sequence-major
    wb_ref  : (E+1, 4E)   rows 0..E-1: [Wq^T*scale | Wk^T | Wv^T | Wo^T]; row E: biases
    out_ref : (Lq, N*E)   attention output, sequence-major
    attn_ref: (N*Lq, Lk)  head-averaged attention weights (batch-major rows)
    """
    E, H, hd = EMBED, HEADS, HEAD_DIM
    Lq = x1_ref.shape[0]
    Lk = x2_ref.shape[0]
    N = x1_ref.shape[1] // E

    wb = wb_ref[...]                    # (E+1, 4E)
    w = wb[0:E, :]                      # (E, 4E)  pre-transposed weights
    b = wb[E:E + 1, :]                  # (1, 4E)  biases (scale folded into q part)

    x1m = x1_ref[...]                   # (Lq, N*E)
    x2m = x2_ref[...]                   # (Lk, N*E)

    # (L, N, E) -> batch-major (N*L, E) via lane slices + one sublane concat,
    # with x1 and x2 stacked so Q/K/V projections fuse into ONE matmul.
    xcat = jnp.concatenate(
        [x1m[:, n * E:(n + 1) * E] for n in range(N)]
        + [x2m[:, n * E:(n + 1) * E] for n in range(N)], axis=0)   # (N*Lq + N*Lk, E)

    # Fused in-projection: bf16 operands, f32 accumulation, bias broadcast-added once.
    proj = jnp.dot(xcat.astype(jnp.bfloat16),
                   w[:, 0:3 * E].astype(jnp.bfloat16),
                   preferred_element_type=jnp.float32) + b[:, 0:3 * E]

    q = proj[0:N * Lq, 0:E]             # (N*Lq, E)  (1/sqrt(hd) already folded in)
    k = proj[N * Lq:, E:2 * E]          # (N*Lk, E)
    v = proj[N * Lq:, 2 * E:3 * E]      # (N*Lk, E)

    # Head-batched operands (N*H, L, hd), batch index b = n*H + h.
    qb = jnp.concatenate(
        [q[n * Lq:(n + 1) * Lq, h * hd:(h + 1) * hd].reshape(1, Lq, hd)
         for n in range(N) for h in range(H)], axis=0).astype(jnp.bfloat16)
    kb = jnp.concatenate(
        [k[n * Lk:(n + 1) * Lk, h * hd:(h + 1) * hd].reshape(1, Lk, hd)
         for n in range(N) for h in range(H)], axis=0).astype(jnp.bfloat16)
    vb = jnp.concatenate(
        [v[n * Lk:(n + 1) * Lk, h * hd:(h + 1) * hd].reshape(1, Lk, hd)
         for n in range(N) for h in range(H)], axis=0).astype(jnp.bfloat16)

    # Single batched score + softmax + context chain (f32 elementwise math).
    s = jnp.einsum("bqd,bkd->bqk", qb, kb,
                   preferred_element_type=jnp.float32)              # (N*H, Lq, Lk)
    s = s - jnp.max(s, axis=-1, keepdims=True)
    p = jnp.exp(s)
    p = p * pl.reciprocal(jnp.sum(p, axis=-1, keepdims=True), approx=True)

    ctx = jnp.einsum("bqk,bkd->bqd", p.astype(jnp.bfloat16), vb,
                     preferred_element_type=jnp.float32)             # (N*H, Lq, hd)

    # Re-assemble (N*Lq, E) context (heads back along lanes) and project once.
    ctx_flat = jnp.concatenate(
        [jnp.concatenate([ctx[n * H + h] for h in range(H)], axis=-1)
         for n in range(N)], axis=0)                                  # (N*Lq, E)

    out_flat = jnp.dot(ctx_flat.astype(jnp.bfloat16),
                       w[:, 3 * E:4 * E].astype(jnp.bfloat16),
                       preferred_element_type=jnp.float32) + b[:, 3 * E:4 * E]

    # Store directly in sequence-major (Lq, N*E) layout (no wrapper transpose needed).
    for n in range(N):
        out_ref[:, n * E:(n + 1) * E] = out_flat[n * Lq:(n + 1) * Lq, :]

    # Head-averaged attention weights as one contiguous 2D slab.
    inv_h = 1.0 / H
    attn_ref[...] = jnp.concatenate(
        [sum(p[n * H + h] for h in range(H)) * inv_h for n in range(N)], axis=0)


def pack_params(in_proj_w, in_proj_b, out_w, out_b):
    """Pack nn.MultiheadAttention parameters into a single (E+1, 4E) slab.

    Rows 0..E-1 are pre-transposed weights [Wq^T*scale | Wk^T | Wv^T | Wo^T];
    row E is the biases [bq*scale | bk | bv | bo]. 1/sqrt(head_dim) is folded
    into the Q columns and Q bias.
    """
    E = EMBED
    scale = 1.0 / (HEAD_DIM ** 0.5)
    wq, wk, wv = in_proj_w[0:E], in_proj_w[E:2 * E], in_proj_w[2 * E:3 * E]
    bq, bk, bv = in_proj_b[0:E], in_proj_b[E:2 * E], in_proj_b[2 * E:3 * E]
    w_slab = jnp.concatenate([wq.T * scale, wk.T, wv.T, out_w.T], axis=1)       # (E, 4E)
    b_row = jnp.concatenate([bq * scale, bk, bv, out_b]).reshape(1, 4 * E)      # (1, 4E)
    return jnp.concatenate([w_slab, b_row], axis=0)                              # (E+1, 4E)


@jax.jit
def multihead_attention(x1, x2, wb_slab):
    """x1: (Lq, N, E) query; x2: (Lk, N, E) used as both key and value."""
    Lq, N, E = x1.shape
    Lk = x2.shape[0]
    # Free, contiguous reshapes (no transpose, no copy) to lane-dense 2D slabs.
    x1_2d = x1.reshape(Lq, N * E)
    x2_2d = x2.reshape(Lk, N * E)

    flops = (2 * (N * (Lq + Lk)) * E * (3 * E)          # fused QKV projection
             + 2 * (N * HEADS) * Lq * Lk * HEAD_DIM * 2  # scores + context
             + 2 * (N * Lq) * E * E)                     # output projection
    transcendentals = N * HEADS * Lq * Lk + N * HEADS * Lq
    bytes_accessed = 4 * (Lq * N * E + Lk * N * E + (E + 1) * 4 * E
                          + Lq * N * E + N * Lq * Lk)

    vmem = pltpu.MemorySpace.VMEM
    out2d, attn2d = pl.pallas_call(
        _mha_kernel,
        out_shape=(jax.ShapeDtypeStruct((Lq, N * E), jnp.float32),
                   jax.ShapeDtypeStruct((N * Lq, Lk), jnp.float32)),
        in_specs=[pl.BlockSpec(memory_space=vmem) for _ in range(3)],
        out_specs=(pl.BlockSpec(memory_space=vmem),
                   pl.BlockSpec(memory_space=vmem)),
        cost_estimate=pl.CostEstimate(flops=flops,
                                      transcendentals=transcendentals,
                                      bytes_accessed=bytes_accessed),
    )(x1_2d, x2_2d, wb_slab)

    attn_output = out2d.reshape(Lq, N, E)       # free contiguous reshape
    attn_weights = attn2d.reshape(N, Lq, Lk)    # free contiguous reshape
    return attn_output, attn_weights


def _reference(x1, x2, in_proj_w, in_proj_b, out_w, out_b):
    """Pure-JAX f32 reference of eval-mode nn.MultiheadAttention(8, 2)."""
    Lq, N, E = x1.shape
    Lk = x2.shape[0]
    wq, wk, wv = in_proj_w[0:E], in_proj_w[E:2 * E], in_proj_w[2 * E:3 * E]
    bq, bk, bv = in_proj_b[0:E], in_proj_b[E:2 * E], in_proj_b[2 * E:3 * E]
    q = x1 @ wq.T + bq
    k = x2 @ wk.T + bk
    v = x2 @ wv.T + bv

    def split_heads(t, L):
        return t.reshape(L, N, HEADS, HEAD_DIM).transpose(1, 2, 0, 3)  # (N,H,L,hd)

    qh, kh, vh = split_heads(q, Lq), split_heads(k, Lk), split_heads(v, Lk)
    s = jnp.einsum("nhqd,nhkd->nhqk", qh, kh) / (HEAD_DIM ** 0.5)
    p = jax.nn.softmax(s, axis=-1)
    ctx = jnp.einsum("nhqk,nhkd->nhqd", p, vh)                 # (N,H,Lq,hd)
    ctx = ctx.transpose(2, 0, 1, 3).reshape(Lq, N, E)
    out = ctx @ out_w.T + out_b
    return out, p.mean(axis=1)


if __name__ == "__main__":
    Lq, Lk, N, E = 8, 16, 2, EMBED

    key = jax.random.PRNGKey(0)
    k1, k2, k3, k4, k5, k6 = jax.random.split(key, 6)
    x1 = jax.random.normal(k1, (Lq, N, E), jnp.float32)
    x2 = jax.random.normal(k2, (Lk, N, E), jnp.float32)

    # Deterministic parameter init (same shapes as nn.MultiheadAttention(8, 2)).
    in_proj_w = jax.random.normal(k3, (3 * E, E), jnp.float32) * 0.1
    in_proj_b = jax.random.normal(k4, (3 * E,), jnp.float32) * 0.1
    out_w = jax.random.normal(k5, (E, E), jnp.float32) * 0.1
    out_b = jax.random.normal(k6, (E,), jnp.float32) * 0.1

    wb_slab = pack_params(in_proj_w, in_proj_b, out_w, out_b)

    out, attn_w = multihead_attention(x1, x2, wb_slab)
    jax.block_until_ready((out, attn_w))

    ref_out, ref_attn = _reference(x1, x2, in_proj_w, in_proj_b, out_w, out_b)
    assert out.shape == (Lq, N, E) and attn_w.shape == (N, Lq, Lk)
    # Tolerance accommodates bf16 MXU operands + pl.reciprocal(approx=True).
    assert jnp.allclose(out, ref_out, atol=2e-2, rtol=2e-2)
    assert jnp.allclose(attn_w, ref_attn, atol=2e-2, rtol=2e-2)

    print("KERNEL_OK")
</pallas_src>

<mosaic_0001>
module attributes {stable_mosaic.version = 11 : i64} {
  func.func @_mha_kernel(%arg0: memref<8x16xf32, #tpu.memory_space<vmem>>, %arg1: memref<16x16xf32, #tpu.memory_space<vmem>>, %arg2: memref<9x32xf32, #tpu.memory_space<vmem>>, %arg3: memref<8x16xf32, #tpu.memory_space<vmem>>, %arg4: memref<16x16xf32, #tpu.memory_space<vmem>>) attributes {dimension_semantics = [], scalar_prefetch = 0 : i64, scratch_operands = 0 : i64, tpu.core_type = #tpu.core_type<tc>} {
    %c0 = arith.constant 0 : index
    %c0_0 = arith.constant 0 : index
    %0 = vector.load %arg2[%c0, %c0_0] : memref<9x32xf32, #tpu.memory_space<vmem>>, vector<9x32xf32>
    %1 = vector.extract_strided_slice %0 {offsets = [0, 0], sizes = [8, 32], strides = [1, 1]} : vector<9x32xf32> to vector<8x32xf32>
    %2 = vector.extract_strided_slice %0 {offsets = [8, 0], sizes = [1, 32], strides = [1, 1]} : vector<9x32xf32> to vector<1x32xf32>
    %c0_1 = arith.constant 0 : index
    %c0_2 = arith.constant 0 : index
    %3 = vector.load %arg0[%c0_1, %c0_2] : memref<8x16xf32, #tpu.memory_space<vmem>>, vector<8x16xf32>
    %c0_3 = arith.constant 0 : index
    %c0_4 = arith.constant 0 : index
    %4 = vector.load %arg1[%c0_3, %c0_4] : memref<16x16xf32, #tpu.memory_space<vmem>>, vector<16x16xf32>
    %5 = vector.extract_strided_slice %3 {offsets = [0, 0], sizes = [8, 8], strides = [1, 1]} : vector<8x16xf32> to vector<8x8xf32>
    %6 = vector.extract_strided_slice %3 {offsets = [0, 8], sizes = [8, 8], strides = [1, 1]} : vector<8x16xf32> to vector<8x8xf32>
    %7 = vector.extract_strided_slice %4 {offsets = [0, 0], sizes = [16, 8], strides = [1, 1]} : vector<16x16xf32> to vector<16x8xf32>
    %8 = vector.extract_strided_slice %4 {offsets = [0, 8], sizes = [16, 8], strides = [1, 1]} : vector<16x16xf32> to vector<16x8xf32>
    %9 = tpu.concatenate %5, %6, %7, %8 in 0 : vector<8x8xf32>, vector<8x8xf32>, vector<16x8xf32>, vector<16x8xf32> -> vector<48x8xf32>
    %10 = arith.truncf %9 : vector<48x8xf32> to vector<48x8xbf16>
    %11 = vector.extract_strided_slice %1 {offsets = [0, 0], sizes = [8, 24], strides = [1, 1]} : vector<8x32xf32> to vector<8x24xf32>
    %12 = arith.truncf %11 : vector<8x24xf32> to vector<8x24xbf16>
    %cst = arith.constant dense<0.000000e+00> : vector<48x24xf32>
    %13 = tpu.matmul %10, %12, %cst {dimension_numbers = #tpu.dot_dimension_numbers<[1], [0], [0], [1], [0, 0, 1, 1], [], []>} : vector<48x8xbf16>, vector<8x24xbf16>, vector<48x24xf32> -> vector<48x24xf32>
    %14 = vector.extract_strided_slice %2 {offsets = [0, 0], sizes = [1, 24], strides = [1, 1]} : vector<1x32xf32> to vector<1x24xf32>
    %15 = vector.broadcast %14 : vector<1x24xf32> to vector<48x24xf32>
    %16 = arith.addf %13, %15 : vector<48x24xf32>
    %17 = vector.extract_strided_slice %16 {offsets = [0, 0], sizes = [16, 8], strides = [1, 1]} : vector<48x24xf32> to vector<16x8xf32>
    %18 = vector.extract_strided_slice %16 {offsets = [16, 8], sizes = [32, 8], strides = [1, 1]} : vector<48x24xf32> to vector<32x8xf32>
    %19 = vector.extract_strided_slice %16 {offsets = [16, 16], sizes = [32, 8], strides = [1, 1]} : vector<48x24xf32> to vector<32x8xf32>
    %20 = vector.extract_strided_slice %17 {offsets = [0, 0], sizes = [8, 4], strides = [1, 1]} : vector<16x8xf32> to vector<8x4xf32>
    %21 = vector.shape_cast %20 : vector<8x4xf32> to vector<1x8x4xf32>
    %22 = vector.extract_strided_slice %17 {offsets = [0, 4], sizes = [8, 4], strides = [1, 1]} : vector<16x8xf32> to vector<8x4xf32>
    %23 = vector.shape_cast %22 : vector<8x4xf32> to vector<1x8x4xf32>
    %24 = vector.extract_strided_slice %17 {offsets = [8, 0], sizes = [8, 4], strides = [1, 1]} : vector<16x8xf32> to vector<8x4xf32>
    %25 = vector.shape_cast %24 : vector<8x4xf32> to vector<1x8x4xf32>
    %26 = vector.extract_strided_slice %17 {offsets = [8, 4], sizes = [8, 4], strides = [1, 1]} : vector<16x8xf32> to vector<8x4xf32>
    %27 = vector.shape_cast %26 : vector<8x4xf32> to vector<1x8x4xf32>
    %28 = tpu.concatenate %21, %23, %25, %27 in 0 : vector<1x8x4xf32>, vector<1x8x4xf32>, vector<1x8x4xf32>, vector<1x8x4xf32> -> vector<4x8x4xf32>
    %29 = arith.truncf %28 : vector<4x8x4xf32> to vector<4x8x4xbf16>
    %30 = vector.extract_strided_slice %18 {offsets = [0, 0], sizes = [16, 4], strides = [1, 1]} : vector<32x8xf32> to vector<16x4xf32>
    %31 = vector.shape_cast %30 : vector<16x4xf32> to vector<1x16x4xf32>
    %32 = vector.extract_strided_slice %18 {offsets = [0, 4], sizes = [16, 4], strides = [1, 1]} : vector<32x8xf32> to vector<16x4xf32>
    %33 = vector.shape_cast %32 : vector<16x4xf32> to vector<1x16x4xf32>
    %34 = vector.extract_strided_slice %18 {offsets = [16, 0], sizes = [16, 4], strides = [1, 1]} : vector<32x8xf32> to vector<16x4xf32>
    %35 = vector.shape_cast %34 : vector<16x4xf32> to vector<1x16x4xf32>
    %36 = vector.extract_strided_slice %18 {offsets = [16, 4], sizes = [16, 4], strides = [1, 1]} : vector<32x8xf32> to vector<16x4xf32>
    %37 = vector.shape_cast %36 : vector<16x4xf32> to vector<1x16x4xf32>
    %38 = tpu.concatenate %31, %33, %35, %37 in 0 : vector<1x16x4xf32>, vector<1x16x4xf32>, vector<1x16x4xf32>, vector<1x16x4xf32> -> vector<4x16x4xf32>
    %39 = arith.truncf %38 : vector<4x16x4xf32> to vector<4x16x4xbf16>
    %40 = vector.extract_strided_slice %19 {offsets = [0, 0], sizes = [16, 4], strides = [1, 1]} : vector<32x8xf32> to vector<16x4xf32>
    %41 = vector.shape_cast %40 : vector<16x4xf32> to vector<1x16x4xf32>
    %42 = vector.extract_strided_slice %19 {offsets = [0, 4], sizes = [16, 4], strides = [1, 1]} : vector<32x8xf32> to vector<16x4xf32>
    %43 = vector.shape_cast %42 : vector<16x4xf32> to vector<1x16x4xf32>
    %44 = vector.extract_strided_slice %19 {offsets = [16, 0], sizes = [16, 4], strides = [1, 1]} : vector<32x8xf32> to vector<16x4xf32>
    %45 = vector.shape_cast %44 : vector<16x4xf32> to vector<1x16x4xf32>
    %46 = vector.extract_strided_slice %19 {offsets = [16, 4], sizes = [16, 4], strides = [1, 1]} : vector<32x8xf32> to vector<16x4xf32>
    %47 = vector.shape_cast %46 : vector<16x4xf32> to vector<1x16x4xf32>
    %48 = tpu.concatenate %41, %43, %45, %47 in 0 : vector<1x16x4xf32>, vector<1x16x4xf32>, vector<1x16x4xf32>, vector<1x16x4xf32> -> vector<4x16x4xf32>
    %49 = arith.truncf %48 : vector<4x16x4xf32> to vector<4x16x4xbf16>
    "tpu.trace_start"() <{level = 10 : i32, message = "bqd,bkd->bqk"}> : () -> ()
    %cst_5 = arith.constant dense<0.000000e+00> : vector<4x8x16xf32>
    %50 = tpu.matmul %29, %39, %cst_5 {dimension_numbers = #tpu.dot_dimension_numbers<[2], [2], [1], [1], [0, 0, 0, 1, 1, 1], [0], [0]>} : vector<4x8x4xbf16>, vector<4x16x4xbf16>, vector<4x8x16xf32> -> vector<4x8x16xf32>
    "tpu.trace_stop"() : () -> ()
    %cst_6 = arith.constant dense<0xFF800000> : vector<4x8xf32>
    %51 = vector.multi_reduction <maximumf>, %50, %cst_6 [2] : vector<4x8x16xf32> to vector<4x8xf32>
    %52 = vector.shape_cast %51 : vector<4x8xf32> to vector<4x8x1xf32>
    %53 = vector.broadcast %52 : vector<4x8x1xf32> to vector<4x8x16xf32>
    %54 = arith.subf %50, %53 : vector<4x8x16xf32>
    %55 = math.exp %54 : vector<4x8x16xf32>
    %cst_7 = arith.constant dense<0.000000e+00> : vector<4x8xf32>
    %56 = vector.multi_reduction <add>, %55, %cst_7 [2] : vector<4x8x16xf32> to vector<4x8xf32>
    %57 = vector.shape_cast %56 : vector<4x8xf32> to vector<4x8x1xf32>
    %58 = tpu.reciprocal %57 {approx = true} : vector<4x8x1xf32> -> vector<4x8x1xf32>
    %59 = vector.broadcast %58 : vector<4x8x1xf32> to vector<4x8x16xf32>
    %60 = arith.mulf %55, %59 : vector<4x8x16xf32>
    %61 = arith.truncf %60 : vector<4x8x16xf32> to vector<4x8x16xbf16>
    "tpu.trace_start"() <{level = 10 : i32, message = "bqk,bkd->bqd"}> : () -> ()
    %cst_8 = arith.constant dense<0.000000e+00> : vector<4x8x4xf32>
    %62 = tpu.matmul %61, %49, %cst_8 {dimension_numbers = #tpu.dot_dimension_numbers<[2], [1], [1], [2], [0, 0, 0, 1, 1, 2], [0], [0]>} : vector<4x8x16xbf16>, vector<4x16x4xbf16>, vector<4x8x4xf32> -> vector<4x8x4xf32>
    "tpu.trace_stop"() : () -> ()
    %63 = vector.extract_strided_slice %62 {offsets = [0, 0, 0], sizes = [1, 8, 4], strides = [1, 1, 1]} : vector<4x8x4xf32> to vector<1x8x4xf32>
    %64 = vector.shape_cast %63 : vector<1x8x4xf32> to vector<8x4xf32>
    %65 = vector.extract_strided_slice %62 {offsets = [1, 0, 0], sizes = [1, 8, 4], strides = [1, 1, 1]} : vector<4x8x4xf32> to vector<1x8x4xf32>
    %66 = vector.shape_cast %65 : vector<1x8x4xf32> to vector<8x4xf32>
    %67 = tpu.concatenate %64, %66 in 1 : vector<8x4xf32>, vector<8x4xf32> -> vector<8x8xf32>
    %68 = vector.extract_strided_slice %62 {offsets = [2, 0, 0], sizes = [1, 8, 4], strides = [1, 1, 1]} : vector<4x8x4xf32> to vector<1x8x4xf32>
    %69 = vector.shape_cast %68 : vector<1x8x4xf32> to vector<8x4xf32>
    %70 = vector.extract_strided_slice %62 {offsets = [3, 0, 0], sizes = [1, 8, 4], strides = [1, 1, 1]} : vector<4x8x4xf32> to vector<1x8x4xf32>
    %71 = vector.shape_cast %70 : vector<1x8x4xf32> to vector<8x4xf32>
    %72 = tpu.concatenate %69, %71 in 1 : vector<8x4xf32>, vector<8x4xf32> -> vector<8x8xf32>
    %73 = tpu.concatenate %67, %72 in 0 : vector<8x8xf32>, vector<8x8xf32> -> vector<16x8xf32>
    %74 = arith.truncf %73 : vector<16x8xf32> to vector<16x8xbf16>
    %75 = vector.extract_strided_slice %1 {offsets = [0, 24], sizes = [8, 8], strides = [1, 1]} : vector<8x32xf32> to vector<8x8xf32>
    %76 = arith.truncf %75 : vector<8x8xf32> to vector<8x8xbf16>
    %cst_9 = arith.constant dense<0.000000e+00> : vector<16x8xf32>
    %77 = tpu.matmul %74, %76, %cst_9 {dimension_numbers = #tpu.dot_dimension_numbers<[1], [0], [0], [1], [0, 0, 1, 1], [], []>} : vector<16x8xbf16>, vector<8x8xbf16>, vector<16x8xf32> -> vector<16x8xf32>
    %78 = vector.extract_strided_slice %2 {offsets = [0, 24], sizes = [1, 8], strides = [1, 1]} : vector<1x32xf32> to vector<1x8xf32>
    %79 = vector.broadcast %78 : vector<1x8xf32> to vector<16x8xf32>
    %80 = arith.addf %77, %79 : vector<16x8xf32>
    %81 = vector.extract_strided_slice %80 {offsets = [0, 0], sizes = [8, 8], strides = [1, 1]} : vector<16x8xf32> to vector<8x8xf32>
    %c0_10 = arith.constant 0 : index
    %c0_11 = arith.constant 0 : index
    %82 = vector.load %arg3[%c0_10, %c0_11] : memref<8x16xf32, #tpu.memory_space<vmem>>, vector<8x8xf32>
    tpu.vector_store %arg3[%c0_10, %c0_11], %81 {strides = array<i32>} : memref<8x16xf32, #tpu.memory_space<vmem>>, vector<8x8xf32>,
    %83 = vector.extract_strided_slice %80 {offsets = [8, 0], sizes = [8, 8], strides = [1, 1]} : vector<16x8xf32> to vector<8x8xf32>
    %c0_12 = arith.constant 0 : index
    %c8 = arith.constant 8 : index
    %84 = vector.load %arg3[%c0_12, %c8] : memref<8x16xf32, #tpu.memory_space<vmem>>, vector<8x8xf32>
    tpu.vector_store %arg3[%c0_12, %c8], %83 {strides = array<i32>} : memref<8x16xf32, #tpu.memory_space<vmem>>, vector<8x8xf32>,
    %85 = vector.extract_strided_slice %60 {offsets = [0, 0, 0], sizes = [1, 8, 16], strides = [1, 1, 1]} : vector<4x8x16xf32> to vector<1x8x16xf32>
    %86 = vector.shape_cast %85 : vector<1x8x16xf32> to vector<8x16xf32>
    %cst_13 = arith.constant 0.000000e+00 : f32
    %87 = vector.broadcast %cst_13 : f32 to vector<8x16xf32>
    %88 = arith.addf %87, %86 : vector<8x16xf32>
    %89 = vector.extract_strided_slice %60 {offsets = [1, 0, 0], sizes = [1, 8, 16], strides = [1, 1, 1]} : vector<4x8x16xf32> to vector<1x8x16xf32>
    %90 = vector.shape_cast %89 : vector<1x8x16xf32> to vector<8x16xf32>
    %91 = arith.addf %88, %90 : vector<8x16xf32>
    %cst_14 = arith.constant 5.000000e-01 : f32
    %92 = vector.broadcast %cst_14 : f32 to vector<8x16xf32>
    %93 = arith.mulf %91, %92 : vector<8x16xf32>
    %94 = vector.extract_strided_slice %60 {offsets = [2, 0, 0], sizes = [1, 8, 16], strides = [1, 1, 1]} : vector<4x8x16xf32> to vector<1x8x16xf32>
    %95 = vector.shape_cast %94 : vector<1x8x16xf32> to vector<8x16xf32>
    %cst_15 = arith.constant 0.000000e+00 : f32
    %96 = vector.broadcast %cst_15 : f32 to vector<8x16xf32>
    %97 = arith.addf %96, %95 : vector<8x16xf32>
    %98 = vector.extract_strided_slice %60 {offsets = [3, 0, 0], sizes = [1, 8, 16], strides = [1, 1, 1]} : vector<4x8x16xf32> to vector<1x8x16xf32>
    %99 = vector.shape_cast %98 : vector<1x8x16xf32> to vector<8x16xf32>
    %100 = arith.addf %97, %99 : vector<8x16xf32>
    %cst_16 = arith.constant 5.000000e-01 : f32
    %101 = vector.broadcast %cst_16 : f32 to vector<8x16xf32>
    %102 = arith.mulf %100, %101 : vector<8x16xf32>
    %103 = tpu.concatenate %93, %102 in 0 : vector<8x16xf32>, vector<8x16xf32> -> vector<16x16xf32>
    %c0_17 = arith.constant 0 : index
    %c0_18 = arith.constant 0 : index
    %104 = vector.load %arg4[%c0_17, %c0_18] : memref<16x16xf32, #tpu.memory_space<vmem>>, vector<16x16xf32>
    tpu.vector_store %arg4[%c0_17, %c0_18], %103 {strides = array<i32>} : memref<16x16xf32, #tpu.memory_space<vmem>>, vector<16x16xf32>,
    return
  }
}

</mosaic_0001>

<llo_original>
// kernel: multihead_attention.1
$region0: #{multihead_attention.1}
  #allocation0 [shape = 'u32[]', space=smem, size = 0x4, offset = 0x4, fixed_abs, tag = 'smem constant byte address 0x4 - core index']
  #allocation1 [shape = 'u32[144,128]{1,0:T(1,128)}', space=vmem, size = 0x12000, scoped, tag = 'internal scratch']
  %s0 = inlined_call_operand.vmem [shape: f32[8,16], index: 0, kind: input, shape index: {}]
  %s1 = inlined_call_operand.vmem [shape: f32[16,16], index: 1, kind: input, shape index: {}]
  %s2 = inlined_call_operand.vmem [shape: f32[9,32], index: 2, kind: input, shape index: {}]
  %s3 = inlined_call_operand.vmem [shape: f32[8,16], index: 3, kind: output, shape index: {0}]
  %s4 = inlined_call_operand.hbm [shape: f32[16,16], index: 4, kind: output, shape index: {1}]
  %5 = xla_tuple %s3, %s4
  %s6 = sld [smem:[#allocation0]]
  $region30: #{multihead_attention.1} parent=0
    _
  %s8 = ssub.s32 1, %s6
  %s9 = scalar_select 0, %s8, %s6
  $region1: #{multihead_attention.1} parent=0
    #allocation2 [shape = 'u8[8192]{0}', space=vmem, size = 0x2000, scoped, tag = 'output window, operand 1, single buffered']
    #allocation3 [shape = 's32[1]{0}', space=sflag, size = 0x4, scoped, tag = 'scoped memory for multihead_attention.1']
    %10 = vsyncpa [#allocation3], 0
    // Predicated region
    $region2: #{multihead_attention.1} parent=1 // pred_check
      _
    $region3: #{multihead_attention.1} parent=1 // pred_check_branch
      %12 = sbr.rel (0) target = $region5
    $region4: #{multihead_attention.1} parent=1 // pred_region
      _
    $region5: #{multihead_attention.1} parent=1 // pred_fallthru
      _
    // Predicated region
    $region6: #{multihead_attention.1} parent=1 // pred_check
      _
    $region7: #{multihead_attention.1} parent=1 // pred_check_branch
      %14 = sbr.rel (0) target = $region9
    $region8: #{multihead_attention.1} parent=1 // pred_region
      _
    $region9: #{multihead_attention.1} parent=1 // pred_fallthru
      _
    // Predicated region
    $region10: #{multihead_attention.1} parent=1 // pred_check
      _
    $region11: #{multihead_attention.1} parent=1 // pred_check_branch
      %16 = sbr.rel (0) target = $region13
    $region12: #{multihead_attention.1} parent=1 // pred_region
      _
    $region13: #{multihead_attention.1} parent=1 // pred_fallthru
      _
    %v18 = vld [vmem:[%s2] sm:$0xff]
    %v19 = vld [vmem:[%s2 + $0x8] sm:$0x1]
    %v20 = vld [vmem:[%s0] sm:$0xff]
    %v21 = vld [vmem:[%s1] sm:$0xff]
    %v22 = vld [vmem:[%s1 + $0x8] sm:$0xff]
    %24 = vrot.lane.b32.xlu0 %v20, 120
    %v25 = vpop.permute.xlu0 %24
    %29 = vrot.lane.b32.xlu0 %v21, 120
    %v30 = vpop.permute.xlu0 %29
    %31 = vrot.lane.b32.xlu0 %v22, 120
    %v32 = vpop.permute.xlu0 %31
    %v35 = vpack.c.bf16 %v25, %v20
    %v36 = vpack.c.bf16 %v22, %v21
    %v37 = vpack.c.bf16 %v32, %v30
    %v38 = vpack.c.bf16 %v18, %v18
    %v39 = vlaneseq
    %v40 = vshrl.u32 %v39, 7
    %v41 = vsub.s32 0, %v40
    %v42 = vrot.slane %v19, %v41
    %vm43 = vcmask 64512
    %v45 = vsel %vm43, %v35, 0
    %v48 = vsel %vm43, %v36, 0
    %v51 = vsel %vm43, %v37, 0
    %vm53 = vcmask 1043456
    %v55 = vsel %vm53, %v38, 0
    %57 = vmatprep.subr.bf16.mxu0 0
    %58 = vmatpush1.bf16.msra.mxu0 %v55
    %59 = vmatprep.subr.bf16.mxu0 0
    %60 = vmatpush1.bf16.msra.mxu0 0
    %61 = vmatprep.subr.bf16.mxu0 0
    %62 = vmatpush1.bf16.msra.mxu0 0
    %63 = vmatprep.subr.bf16.mxu0 0
    %64 = vmatpush1.bf16.msra.mxu0 0
    %65 = vmatprep.subr.bf16.mxu0 0
    %66 = vmatpush1.bf16.msra.mxu0 0
    %67 = vmatprep.subr.bf16.mxu0 0
    %68 = vmatpush1.bf16.msra.mxu0 0
    %69 = vmatprep.subr.bf16.mxu0 0
    %70 = vmatpush1.bf16.msra.mxu0 0
    %71 = vmatprep.subr.bf16.mxu0 0
    %72 = vmatpush1.bf16.msra.mxu0 0
    %73 = vmatprep.subr.bf16.mxu0 0
    %74 = vmatpush1.bf16.msra.mxu0 0
    %75 = vmatprep.subr.bf16.mxu0 0
    %76 = vmatpush1.bf16.msra.mxu0 0
    %77 = vmatprep.subr.bf16.mxu0 0
    %78 = vmatpush1.bf16.msra.mxu0 0
    %79 = vmatprep.subr.bf16.mxu0 0
    %80 = vmatpush1.bf16.msra.mxu0 0
    %81 = vmatprep.subr.bf16.mxu0 0
    %82 = vmatpush1.bf16.msra.mxu0 0
    %83 = vmatprep.subr.bf16.mxu0 0
    %84 = vmatpush1.bf16.msra.mxu0 0
    %85 = vmatprep.subr.bf16.mxu0 0
    %86 = vmatpush1.bf16.msra.mxu0 0
    %87 = vmatprep.subr.bf16.mxu0 0
    %88 = vmatpush1.bf16.msra.mxu0 0
    %89 = vmatprep.mubr.bf16.mxu0 0
    %90 = vmatmul.mubr.bf16.gmra.mrb[0].mxu0 %v45
    %v91 = vpop.f32.mrb[0].mxu0
    %v92 = vadd.f32 %v42, %v91
    %v93 = vpop.f32.mrb[0].mxu0
    %v94 = vpop.f32.mrb[0].mxu0
    %v95 = vadd.f32 %v42, %v94
    %v96 = vpop.f32.mrb[0].mxu0
    %97 = vmatprep.mubr.bf16.mxu0 0
    %98 = vmatmul.mubr.bf16.gmra.mrb[0].mxu0 %v48
    %v99 = vpop.f32.mrb[0].mxu0
    %v100 = vadd.f32 %v42, %v99
    %v101 = vpop.f32.mrb[0].mxu0
    %v102 = vpop.f32.mrb[0].mxu0
    %v103 = vadd.f32 %v42, %v102
    %v104 = vpop.f32.mrb[0].mxu0
    %105 = vmatprep.mubr.bf16.mxu0 0
    %106 = vmatmul.mubr.bf16.gmra.mrb[0].mxu0 %v51
    %v107 = vpop.f32.mrb[0].mxu0
    %v108 = vadd.f32 %v42, %v107
    %v109 = vpop.f32.mrb[0].mxu0
    %v110 = vpop.f32.mrb[0].mxu0
    %v111 = vadd.f32 %v42, %v110
    %v112 = vpop.f32.mrb[0].mxu0
    %113 = vdwg.mxu0
    %115 = vrot.lane.b32.xlu0 %v92, 124
    %v116 = vpop.permute.xlu0 %115
    %119 = vrot.lane.b32.xlu0 %v95, 124
    %v120 = vpop.permute.xlu0 %119
    %v122 = vpack.c.bf16 %v92, %v92
    %v123 = vpack.c.bf16 %v116, %v116
    %v124 = vpack.c.bf16 %v95, %v95
    %v125 = vpack.c.bf16 %v120, %v120
    %128 = vrot.lane.b32.xlu0 %v100, 124
    %v129 = vpop.permute.xlu0 %128
    %130 = vrot.lane.b32.xlu0 %v103, 124
    %v131 = vpop.permute.xlu0 %130
    %136 = vrot.lane.b32.xlu0 %v108, 124
    %v137 = vpop.permute.xlu0 %136
    %138 = vrot.lane.b32.xlu0 %v111, 124
    %v139 = vpop.permute.xlu0 %138
    %v142 = vpack.c.bf16 %v103, %v100
    %v143 = vpack.c.bf16 %v131, %v129
    %v144 = vpack.c.bf16 %v111, %v108
    %v145 = vpack.c.bf16 %v139, %v137
    %147 = vrot.lane.b32.xlu0 %v142, 120
    %v148 = vpop.permute.xlu0 %147
    %vm149 = vcmask 31744
    %v151 = vsel %vm149, %v122, 0
    %v154 = vsel %vm149, %v148, 0
    %156 = vmatprep.subr.bf16.mxu0 0
    %157 = vmatpush1.bf16.xpose.msra.mxu0 %v154
    %158 = vmatprep.subr.bf16.mxu0 0
    %159 = vmatpush1.bf16.xpose.msra.mxu0 0
    %160 = vmatprep.subr.bf16.mxu0 0
    %161 = vmatpush1.bf16.xpose.msra.mxu0 0
    %162 = vmatprep.subr.bf16.mxu0 0
    %163 = vmatpush1.bf16.xpose.msra.mxu0 0
    %164 = vmatprep.subr.bf16.mxu0 0
    %165 = vmatpush1.bf16.xpose.msra.mxu0 0
    %166 = vmatprep.subr.bf16.mxu0 0
    %167 = vmatpush1.bf16.xpose.msra.mxu0 0
    %168 = vmatprep.subr.bf16.mxu0 0
    %169 = vmatpush1.bf16.xpose.msra.mxu0 0
    %170 = vmatprep.subr.bf16.mxu0 0
    %171 = vmatpush1.bf16.xpose.msra.mxu0 0
    %172 = vmatprep.subr.bf16.mxu0 0
    %173 = vmatpush1.bf16.xpose.msra.mxu0 0
    %174 = vmatprep.subr.bf16.mxu0 0
    %175 = vmatpush1.bf16.xpose.msra.mxu0 0
    %176 = vmatprep.subr.bf16.mxu0 0
    %177 = vmatpush1.bf16.xpose.msra.mxu0 0
    %178 = vmatprep.subr.bf16.mxu0 0
    %179 = vmatpush1.bf16.xpose.msra.mxu0 0
    %180 = vmatprep.subr.bf16.mxu0 0
    %181 = vmatpush1.bf16.xpose.msra.mxu0 0
    %182 = vmatprep.subr.bf16.mxu0 0
    %183 = vmatpush1.bf16.xpose.msra.mxu0 0
    %184 = vmatprep.subr.bf16.mxu0 0
    %185 = vmatpush1.bf16.xpose.msra.mxu0 0
    %186 = vmatprep.subr.bf16.mxu0 0
    %187 = vmatpush1.bf16.xpose.msra.mxu0 0
    %188 = vmatprep.mubr.bf16.mxu0 0
    %189 = vmatmul.mubr.bf16.gmra.mrb[0].mxu0 %v151
    %v190 = vpop.f32.mrb[0].mxu0
    %v191 = vadd.f32 0.0, %v190
    %v192 = vpop.f32.mrb[0].mxu0
    %v193 = vpop.f32.mrb[0].mxu0
    %v194 = vpop.f32.mrb[0].mxu0
    %195 = vdwg.mxu0
    %197 = vrot.lane.b32.xlu0 %v143, 120
    %v198 = vpop.permute.xlu0 %197
    %v200 = vsel %vm149, %v123, 0
    %v203 = vsel %vm149, %v198, 0
    %205 = vmatprep.subr.bf16.mxu0 0
    %206 = vmatpush1.bf16.xpose.msra.mxu0 %v203
    %207 = vmatprep.subr.bf16.mxu0 0
    %208 = vmatpush1.bf16.xpose.msra.mxu0 0
    %209 = vmatprep.subr.bf16.mxu0 0
    %210 = vmatpush1.bf16.xpose.msra.mxu0 0
    %211 = vmatprep.subr.bf16.mxu0 0
    %212 = vmatpush1.bf16.xpose.msra.mxu0 0
    %213 = vmatprep.subr.bf16.mxu0 0
    %214 = vmatpush1.bf16.xpose.msra.mxu0 0
    %215 = vmatprep.subr.bf16.mxu0 0
    %216 = vmatpush1.bf16.xpose.msra.mxu0 0
    %217 = vmatprep.subr.bf16.mxu0 0
    %218 = vmatpush1.bf16.xpose.msra.mxu0 0
    %219 = vmatprep.subr.bf16.mxu0 0
    %220 = vmatpush1.bf16.xpose.msra.mxu0 0
    %221 = vmatprep.subr.bf16.mxu0 0
    %222 = vmatpush1.bf16.xpose.msra.mxu0 0
    %223 = vmatprep.subr.bf16.mxu0 0
    %224 = vmatpush1.bf16.xpose.msra.mxu0 0
    %225 = vmatprep.subr.bf16.mxu0 0
    %226 = vmatpush1.bf16.xpose.msra.mxu0 0
    %227 = vmatprep.subr.bf16.mxu0 0
    %228 = vmatpush1.bf16.xpose.msra.mxu0 0
    %229 = vmatprep.subr.bf16.mxu0 0
    %230 = vmatpush1.bf16.xpose.msra.mxu0 0
    %231 = vmatprep.subr.bf16.mxu0 0
    %232 = vmatpush1.bf16.xpose.msra.mxu0 0
    %233 = vmatprep.subr.bf16.mxu0 0
    %234 = vmatpush1.bf16.xpose.msra.mxu0 0
    %235 = vmatprep.subr.bf16.mxu0 0
    %236 = vmatpush1.bf16.xpose.msra.mxu0 0
    %237 = vmatprep.mubr.bf16.mxu0 0
    %238 = vmatmul.mubr.bf16.gmra.mrb[0].mxu0 %v200
    %v239 = vpop.f32.mrb[0].mxu0
    %v240 = vadd.f32 0.0, %v239
    %v241 = vpop.f32.mrb[0].mxu0
    %v242 = vpop.f32.mrb[0].mxu0
    %v243 = vpop.f32.mrb[0].mxu0
    %244 = vdwg.mxu0
    %246 = vrot.lane.b32.xlu0 %v144, 120
    %v247 = vpop.permute.xlu0 %246
    %v249 = vsel %vm149, %v124, 0
    %v252 = vsel %vm149, %v247, 0
    %254 = vmatprep.subr.bf16.mxu0 0
    %255 = vmatpush1.bf16.xpose.msra.mxu0 %v252
    %256 = vmatprep.subr.bf16.mxu0 0
    %257 = vmatpush1.bf16.xpose.msra.mxu0 0
    %258 = vmatprep.subr.bf16.mxu0 0
    %259 = vmatpush1.bf16.xpose.msra.mxu0 0
    %260 = vmatprep.subr.bf16.mxu0 0
    %261 = vmatpush1.bf16.xpose.msra.mxu0 0
    %262 = vmatprep.subr.bf16.mxu0 0
    %263 = vmatpush1.bf16.xpose.msra.mxu0 0
    %264 = vmatprep.subr.bf16.mxu0 0
    %265 = vmatpush1.bf16.xpose.msra.mxu0 0
    %266 = vmatprep.subr.bf16.mxu0 0
    %267 = vmatpush1.bf16.xpose.msra.mxu0 0
    %268 = vmatprep.subr.bf16.mxu0 0
    %269 = vmatpush1.bf16.xpose.msra.mxu0 0
    %270 = vmatprep.subr.bf16.mxu0 0
    %271 = vmatpush1.bf16.xpose.msra.mxu0 0
    %272 = vmatprep.subr.bf16.mxu0 0
    %273 = vmatpush1.bf16.xpose.msra.mxu0 0
    %274 = vmatprep.subr.bf16.mxu0 0
    %275 = vmatpush1.bf16.xpose.msra.mxu0 0
    %276 = vmatprep.subr.bf16.mxu0 0
    %277 = vmatpush1.bf16.xpose.msra.mxu0 0
    %278 = vmatprep.subr.bf16.mxu0 0
    %279 = vmatpush1.bf16.xpose.msra.mxu0 0
    %280 = vmatprep.subr.bf16.mxu0 0
    %281 = vmatpush1.bf16.xpose.msra.mxu0 0
    %282 = vmatprep.subr.bf16.mxu0 0
    %283 = vmatpush1.bf16.xpose.msra.mxu0 0
    %284 = vmatprep.subr.bf16.mxu0 0
    %285 = vmatpush1.bf16.xpose.msra.mxu0 0
    %286 = vmatprep.mubr.bf16.mxu0 0
    %287 = vmatmul.mubr.bf16.gmra.mrb[0].mxu0 %v249
    %v288 = vpop.f32.mrb[0].mxu0
    %v289 = vadd.f32 0.0, %v288
    %v290 = vpop.f32.mrb[0].mxu0
    %v291 = vpop.f32.mrb[0].mxu0
    %v292 = vpop.f32.mrb[0].mxu0
    %293 = vdwg.mxu0
    %295 = vrot.lane.b32.xlu0 %v145, 120
    %v296 = vpop.permute.xlu0 %295
    %v298 = vsel %vm149, %v125, 0
    %v301 = vsel %vm149, %v296, 0
    %303 = vmatprep.subr.bf16.mxu0 0
    %304 = vmatpush1.bf16.xpose.msra.mxu0 %v301
    %305 = vmatprep.subr.bf16.mxu0 0
    %306 = vmatpush1.bf16.xpose.msra.mxu0 0
    %307 = vmatprep.subr.bf16.mxu0 0
    %308 = vmatpush1.bf16.xpose.msra.mxu0 0
    %309 = vmatprep.subr.bf16.mxu0 0
    %310 = vmatpush1.bf16.xpose.msra.mxu0 0
    %311 = vmatprep.subr.bf16.mxu0 0
    %312 = vmatpush1.bf16.xpose.msra.mxu0 0
    %313 = vmatprep.subr.bf16.mxu0 0
    %314 = vmatpush1.bf16.xpose.msra.mxu0 0
    %315 = vmatprep.subr.bf16.mxu0 0
    %316 = vmatpush1.bf16.xpose.msra.mxu0 0
    %317 = vmatprep.subr.bf16.mxu0 0
    %318 = vmatpush1.bf16.xpose.msra.mxu0 0
    %319 = vmatprep.subr.bf16.mxu0 0
    %320 = vmatpush1.bf16.xpose.msra.mxu0 0
    %321 = vmatprep.subr.bf16.mxu0 0
    %322 = vmatpush1.bf16.xpose.msra.mxu0 0
    %323 = vmatprep.subr.bf16.mxu0 0
    %324 = vmatpush1.bf16.xpose.msra.mxu0 0
    %325 = vmatprep.subr.bf16.mxu0 0
    %326 = vmatpush1.bf16.xpose.msra.mxu0 0
    %327 = vmatprep.subr.bf16.mxu0 0
    %328 = vmatpush1.bf16.xpose.msra.mxu0 0
    %329 = vmatprep.subr.bf16.mxu0 0
    %330 = vmatpush1.bf16.xpose.msra.mxu0 0
    %331 = vmatprep.subr.bf16.mxu0 0
    %332 = vmatpush1.bf16.xpose.msra.mxu0 0
    %333 = vmatprep.subr.bf16.mxu0 0
    %334 = vmatpush1.bf16.xpose.msra.mxu0 0
    %335 = vmatprep.mubr.bf16.mxu0 0
    %336 = vmatmul.mubr.bf16.gmra.mrb[0].mxu0 %v298
    %v337 = vpop.f32.mrb[0].mxu0
    %v338 = vadd.f32 0.0, %v337
    %v339 = vpop.f32.mrb[0].mxu0
    %v340 = vpop.f32.mrb[0].mxu0
    %v341 = vpop.f32.mrb[0].mxu0
    %342 = vdwg.mxu0
    %vm343 = vcmask 130048
    %v344 = vsel %vm343, %v191, -inf
    %345 = vmax.xlane.f32.xlu0 %v344
    %v346 = vpop.xlane.xlu0 %345
    %v347 = vsel %vm343, %v240, -inf
    %348 = vmax.xlane.f32.xlu0 %v347
    %v349 = vpop.xlane.xlu0 %348
    %v350 = vsel %vm343, %v289, -inf
    %351 = vmax.xlane.f32.xlu0 %v350
    %v352 = vpop.xlane.xlu0 %351
    %v353 = vsel %vm343, %v338, -inf
    %354 = vmax.xlane.f32.xlu0 %v353
    %v355 = vpop.xlane.xlu0 %354
    %v356 = vsub.f32 %v191, %v346
    %v357 = vsub.f32 %v240, %v349
    %v358 = vsub.f32 %v289, %v352
    %v359 = vsub.f32 %v338, %v355
    %v360 = vmul.f32 %v356, 1.442695
    %v361 = vpow.pop %v360
    %v362 = vmul.f32 %v357, 1.442695
    %v363 = vpow.pop %v362
    %v364 = vmul.f32 %v358, 1.442695
    %v365 = vpow.pop %v364
    %v366 = vmul.f32 %v359, 1.442695
    %v367 = vpow.pop %v366
    %v368 = vsel %vm343, %v361, 0.0
    %369 = vadd.xlane.f32.xlu0 %v368
    %v370 = vpop.xlane.xlu0 %369
    %v371 = vsel %vm343, %v363, 0.0
    %372 = vadd.xlane.f32.xlu0 %v371
    %v373 = vpop.xlane.xlu0 %372
    %v374 = vsel %vm343, %v365, 0.0
    %375 = vadd.xlane.f32.xlu0 %v374
    %v376 = vpop.xlane.xlu0 %375
    %v377 = vsel %vm343, %v367, 0.0
    %378 = vadd.xlane.f32.xlu0 %v377
    %v379 = vpop.xlane.xlu0 %378
    %v380 = vrcp.pop %v370
    %v381 = vrcp.pop %v373
    %v382 = vrcp.pop %v376
    %v383 = vrcp.pop %v379
    %v384 = vmul.f32 %v361, %v380
    %v385 = vmul.f32 %v363, %v381
    %v386 = vmul.f32 %v365, %v382
    %v387 = vmul.f32 %v367, %v383
    %v388 = vpack.c.bf16 %v384, %v384
    %v389 = vpack.c.bf16 %v385, %v385
    %v390 = vpack.c.bf16 %v386, %v386
    %v391 = vpack.c.bf16 %v387, %v387
    %392 = vrot.lane.b32.xlu0 %v142, 112
    %v393 = vpop.permute.xlu0 %392
    %v396 = vsel %vm343, %v388, 0
    %398 = vmatprep.subr.bf16.mxu0 0
    %399 = vmatpush1.bf16.msra.mxu0 %v393
    %400 = vmatprep.subr.bf16.mxu0 0
    %401 = vmatpush1.bf16.msra.mxu0 0
    %402 = vmatprep.subr.bf16.mxu0 0
    %403 = vmatpush1.bf16.msra.mxu0 0
    %404 = vmatprep.subr.bf16.mxu0 0
    %405 = vmatpush1.bf16.msra.mxu0 0
    %406 = vmatprep.subr.bf16.mxu0 0
    %407 = vmatpush1.bf16.msra.mxu0 0
    %408 = vmatprep.subr.bf16.mxu0 0
    %409 = vmatpush1.bf16.msra.mxu0 0
    %410 = vmatprep.subr.bf16.mxu0 0
    %411 = vmatpush1.bf16.msra.mxu0 0
    %412 = vmatprep.subr.bf16.mxu0 0
    %413 = vmatpush1.bf16.msra.mxu0 0
    %414 = vmatprep.subr.bf16.mxu0 0
    %415 = vmatpush1.bf16.msra.mxu0 0
    %416 = vmatprep.subr.bf16.mxu0 0
    %417 = vmatpush1.bf16.msra.mxu0 0
    %418 = vmatprep.subr.bf16.mxu0 0
    %419 = vmatpush1.bf16.msra.mxu0 0
    %420 = vmatprep.subr.bf16.mxu0 0
    %421 = vmatpush1.bf16.msra.mxu0 0
    %422 = vmatprep.subr.bf16.mxu0 0
    %423 = vmatpush1.bf16.msra.mxu0 0
    %424 = vmatprep.subr.bf16.mxu0 0
    %425 = vmatpush1.bf16.msra.mxu0 0
    %426 = vmatprep.subr.bf16.mxu0 0
    %427 = vmatpush1.bf16.msra.mxu0 0
    %428 = vmatprep.subr.bf16.mxu0 0
    %429 = vmatpush1.bf16.msra.mxu0 0
    %430 = vmatprep.mubr.bf16.mxu0 0
    %431 = vmatmul.mubr.bf16.gmra.mrb[0].mxu0 %v396
    %v432 = vpop.f32.mrb[0].mxu0
    %v433 = vadd.f32 0.0, %v432
    %v434 = vpop.f32.mrb[0].mxu0
    %v435 = vpop.f32.mrb[0].mxu0
    %v436 = vpop.f32.mrb[0].mxu0
    %437 = vdwg.mxu0
    %438 = vrot.lane.b32.xlu0 %v143, 112
    %v439 = vpop.permute.xlu0 %438
    %v442 = vsel %vm343, %v389, 0
    %444 = vmatprep.subr.bf16.mxu0 0
    %445 = vmatpush1.bf16.msra.mxu0 %v439
    %446 = vmatprep.subr.bf16.mxu0 0
    %447 = vmatpush1.bf16.msra.mxu0 0
    %448 = vmatprep.subr.bf16.mxu0 0
    %449 = vmatpush1.bf16.msra.mxu0 0
    %450 = vmatprep.subr.bf16.mxu0 0
    %451 = vmatpush1.bf16.msra.mxu0 0
    %452 = vmatprep.subr.bf16.mxu0 0
    %453 = vmatpush1.bf16.msra.mxu0 0
    %454 = vmatprep.subr.bf16.mxu0 0
    %455 = vmatpush1.bf16.msra.mxu0 0
    %456 = vmatprep.subr.bf16.mxu0 0
    %457 = vmatpush1.bf16.msra.mxu0 0
    %458 = vmatprep.subr.bf16.mxu0 0
    %459 = vmatpush1.bf16.msra.mxu0 0
    %460 = vmatprep.subr.bf16.mxu0 0
    %461 = vmatpush1.bf16.msra.mxu0 0
    %462 = vmatprep.subr.bf16.mxu0 0
    %463 = vmatpush1.bf16.msra.mxu0 0
    %464 = vmatprep.subr.bf16.mxu0 0
    %465 = vmatpush1.bf16.msra.mxu0 0
    %466 = vmatprep.subr.bf16.mxu0 0
    %467 = vmatpush1.bf16.msra.mxu0 0
    %468 = vmatprep.subr.bf16.mxu0 0
    %469 = vmatpush1.bf16.msra.mxu0 0
    %470 = vmatprep.subr.bf16.mxu0 0
    %471 = vmatpush1.bf16.msra.mxu0 0
    %472 = vmatprep.subr.bf16.mxu0 0
    %473 = vmatpush1.bf16.msra.mxu0 0
    %474 = vmatprep.subr.bf16.mxu0 0
    %475 = vmatpush1.bf16.msra.mxu0 0
    %476 = vmatprep.mubr.bf16.mxu0 0
    %477 = vmatmul.mubr.bf16.gmra.mrb[0].mxu0 %v442
    %v478 = vpop.f32.mrb[0].mxu0
    %v479 = vadd.f32 0.0, %v478
    %v480 = vpop.f32.mrb[0].mxu0
    %v481 = vpop.f32.mrb[0].mxu0
    %v482 = vpop.f32.mrb[0].mxu0
    %483 = vdwg.mxu0
    %484 = vrot.lane.b32.xlu0 %v144, 112
    %v485 = vpop.permute.xlu0 %484
    %v488 = vsel %vm343, %v390, 0
    %490 = vmatprep.subr.bf16.mxu0 0
    %491 = vmatpush1.bf16.msra.mxu0 %v485
    %492 = vmatprep.subr.bf16.mxu0 0
    %493 = vmatpush1.bf16.msra.mxu0 0
    %494 = vmatprep.subr.bf16.mxu0 0
    %495 = vmatpush1.bf16.msra.mxu0 0
    %496 = vmatprep.subr.bf16.mxu0 0
    %497 = vmatpush1.bf16.msra.mxu0 0
    %498 = vmatprep.subr.bf16.mxu0 0
    %499 = vmatpush1.bf16.msra.mxu0 0
    %500 = vmatprep.subr.bf16.mxu0 0
    %501 = vmatpush1.bf16.msra.mxu0 0
    %502 = vmatprep.subr.bf16.mxu0 0
    %503 = vmatpush1.bf16.msra.mxu0 0
    %504 = vmatprep.subr.bf16.mxu0 0
    %505 = vmatpush1.bf16.msra.mxu0 0
    %506 = vmatprep.subr.bf16.mxu0 0
    %507 = vmatpush1.bf16.msra.mxu0 0
    %508 = vmatprep.subr.bf16.mxu0 0
    %509 = vmatpush1.bf16.msra.mxu0 0
    %510 = vmatprep.subr.bf16.mxu0 0
    %511 = vmatpush1.bf16.msra.mxu0 0
    %512 = vmatprep.subr.bf16.mxu0 0
    %513 = vmatpush1.bf16.msra.mxu0 0
    %514 = vmatprep.subr.bf16.mxu0 0
    %515 = vmatpush1.bf16.msra.mxu0 0
    %516 = vmatprep.subr.bf16.mxu0 0
    %517 = vmatpush1.bf16.msra.mxu0 0
    %518 = vmatprep.subr.bf16.mxu0 0
    %519 = vmatpush1.bf16.msra.mxu0 0
    %520 = vmatprep.subr.bf16.mxu0 0
    %521 = vmatpush1.bf16.msra.mxu0 0
    %522 = vmatprep.mubr.bf16.mxu0 0
    %523 = vmatmul.mubr.bf16.gmra.mrb[0].mxu0 %v488
    %v524 = vpop.f32.mrb[0].mxu0
    %v525 = vadd.f32 0.0, %v524
    %v526 = vpop.f32.mrb[0].mxu0
    %v527 = vpop.f32.mrb[0].mxu0
    %v528 = vpop.f32.mrb[0].mxu0
    %529 = vdwg.mxu0
    %530 = vrot.lane.b32.xlu0 %v145, 112
    %v531 = vpop.permute.xlu0 %530
    %v534 = vsel %vm343, %v391, 0
    %536 = vmatprep.subr.bf16.mxu0 0
    %537 = vmatpush1.bf16.msra.mxu0 %v531
    %538 = vmatprep.subr.bf16.mxu0 0
    %539 = vmatpush1.bf16.msra.mxu0 0
    %540 = vmatprep.subr.bf16.mxu0 0
    %541 = vmatpush1.bf16.msra.mxu0 0
    %542 = vmatprep.subr.bf16.mxu0 0
    %543 = vmatpush1.bf16.msra.mxu0 0
    %544 = vmatprep.subr.bf16.mxu0 0
    %545 = vmatpush1.bf16.msra.mxu0 0
    %546 = vmatprep.subr.bf16.mxu0 0
    %547 = vmatpush1.bf16.msra.mxu0 0
    %548 = vmatprep.subr.bf16.mxu0 0
    %549 = vmatpush1.bf16.msra.mxu0 0
    %550 = vmatprep.subr.bf16.mxu0 0
    %551 = vmatpush1.bf16.msra.mxu0 0
    %552 = vmatprep.subr.bf16.mxu0 0
    %553 = vmatpush1.bf16.msra.mxu0 0
    %554 = vmatprep.subr.bf16.mxu0 0
    %555 = vmatpush1.bf16.msra.mxu0 0
    %556 = vmatprep.subr.bf16.mxu0 0
    %557 = vmatpush1.bf16.msra.mxu0 0
    %558 = vmatprep.subr.bf16.mxu0 0
    %559 = vmatpush1.bf16.msra.mxu0 0
    %560 = vmatprep.subr.bf16.mxu0 0
    %561 = vmatpush1.bf16.msra.mxu0 0
    %562 = vmatprep.subr.bf16.mxu0 0
    %563 = vmatpush1.bf16.msra.mxu0 0
    %564 = vmatprep.subr.bf16.mxu0 0
    %565 = vmatpush1.bf16.msra.mxu0 0
    %566 = vmatprep.subr.bf16.mxu0 0
    %567 = vmatpush1.bf16.msra.mxu0 0
    %568 = vmatprep.mubr.bf16.mxu0 0
    %569 = vmatmul.mubr.bf16.gmra.mrb[0].mxu0 %v534
    %v570 = vpop.f32.mrb[0].mxu0
    %v571 = vadd.f32 0.0, %v570
    %v572 = vpop.f32.mrb[0].mxu0
    %v573 = vpop.f32.mrb[0].mxu0
    %v574 = vpop.f32.mrb[0].mxu0
    %575 = vdwg.mxu0
    %577 = vrot.lane.b32.xlu0 %v479, 4
    %v578 = vpop.permute.xlu0 %577
    %v580 = vsel %vm149, %v433, %v578
    %582 = vrot.lane.b32.xlu0 %v571, 4
    %v583 = vpop.permute.xlu0 %582
    %v585 = vsel %vm149, %v525, %v583
    %v586 = vpack.c.bf16 %v585, %v580
    %588 = vrot.lane.b32.xlu0 %v38, 104
    %v589 = vpop.permute.xlu0 %588
    %591 = vrot.lane.b32.xlu0 %v42, 104
    %v592 = vpop.permute.xlu0 %591
    %v595 = vsel %vm43, %v586, 0
    %v598 = vsel %vm53, %v589, 0
    %600 = vmatprep.subr.bf16.mxu0 0
    %601 = vmatpush1.bf16.msra.mxu0 %v598
    %602 = vmatprep.subr.bf16.mxu0 0
    %603 = vmatpush1.bf16.msra.mxu0 0
    %604 = vmatprep.subr.bf16.mxu0 0
    %605 = vmatpush1.bf16.msra.mxu0 0
    %606 = vmatprep.subr.bf16.mxu0 0
    %607 = vmatpush1.bf16.msra.mxu0 0
    %608 = vmatprep.subr.bf16.mxu0 0
    %609 = vmatpush1.bf16.msra.mxu0 0
    %610 = vmatprep.subr.bf16.mxu0 0
    %611 = vmatpush1.bf16.msra.mxu0 0
    %612 = vmatprep.subr.bf16.mxu0 0
    %613 = vmatpush1.bf16.msra.mxu0 0
    %614 = vmatprep.subr.bf16.mxu0 0
    %615 = vmatpush1.bf16.msra.mxu0 0
    %616 = vmatprep.subr.bf16.mxu0 0
    %617 = vmatpush1.bf16.msra.mxu0 0
    %618 = vmatprep.subr.bf16.mxu0 0
    %619 = vmatpush1.bf16.msra.mxu0 0
    %620 = vmatprep.subr.bf16.mxu0 0
    %621 = vmatpush1.bf16.msra.mxu0 0
    %622 = vmatprep.subr.bf16.mxu0 0
    %623 = vmatpush1.bf16.msra.mxu0 0
    %624 = vmatprep.subr.bf16.mxu0 0
    %625 = vmatpush1.bf16.msra.mxu0 0
    %626 = vmatprep.subr.bf16.mxu0 0
    %627 = vmatpush1.bf16.msra.mxu0 0
    %628 = vmatprep.subr.bf16.mxu0 0
    %629 = vmatpush1.bf16.msra.mxu0 0
    %630 = vmatprep.subr.bf16.mxu0 0
    %631 = vmatpush1.bf16.msra.mxu0 0
    %632 = vmatprep.mubr.bf16.mxu0 0
    %633 = vmatmul.mubr.bf16.gmra.mrb[0].mxu0 %v595
    %v634 = vpop.f32.mrb[0].mxu0
    %v635 = vadd.f32 %v592, %v634
    %v636 = vpop.f32.mrb[0].mxu0
    %v637 = vpop.f32.mrb[0].mxu0
    %v638 = vadd.f32 %v592, %v637
    %v639 = vpop.f32.mrb[0].mxu0
    %640 = vdwg.mxu0
    %641 = vst.msk [vmem:[%s3] sm:$0xff] %vm43, %v635
    %643 = vrot.lane.b32.xlu0 %v638, 8
    %v644 = vpop.permute.xlu0 %643
    %vm646 = vcmask 130112
    %647 = vst.msk [vmem:[%s3] sm:$0xff] %vm646, %v644
    %v648 = vadd.f32 %v384, 0.0
    %v649 = vadd.f32 %v648, %v385
    %v650 = vmul.f32 %v649, 0.5
    %v651 = vadd.f32 %v386, 0.0
    %v652 = vadd.f32 %v651, %v387
    %v653 = vmul.f32 %v652, 0.5
    %654 = vst.msk [vmem:[#allocation2] sm:$0xff] %vm343, %v650
    %655 = vst.msk [vmem:[#allocation2 + $0x8] sm:$0xff] %vm343, %v653
    // Predicated region
    $region14: #{multihead_attention.1} parent=1 // pred_check
      _
    $region15: #{multihead_attention.1} parent=1 // pred_check_branch
      %657 = sbr.rel (0) target = $region17
    $region16: #{multihead_attention.1} parent=1 // pred_region
      _
    $region17: #{multihead_attention.1} parent=1 // pred_fallthru
      _
    // Predicated region
    $region18: #{multihead_attention.1} parent=1 // pred_check
      _
    $region19: #{multihead_attention.1} parent=1 // pred_check_branch
      %659 = sbr.rel (0) target = $region21
    $region20: #{multihead_attention.1} parent=1 // pred_region
      %s661 = ssub.s32 256, 256
      %662 = vsyncadd [#allocation3], %s661
      %s663 = sshll.u32 [#allocation2], 4
      %s664 = int_to_ptr.vmem [resolvable:$true] %s663
      %669 = dma.vmem_to_hbm [thread:$0]  %s664, 256, %s4, [#allocation3], 128, 128, 8
    $region21: #{multihead_attention.1} parent=1 // pred_fallthru
      _
    // Predicated region
    $region22: #{multihead_attention.1} parent=1 // pred_check
      _
    $region23: #{multihead_attention.1} parent=1 // pred_check_branch
      %671 = sbr.rel (0) target = $region25
    $region24: #{multihead_attention.1} parent=1 // pred_region
      _
    $region25: #{multihead_attention.1} parent=1 // pred_fallthru
      _
    // Predicated region
    $region26: #{multihead_attention.1} parent=1 // pred_check
      _
    $region27: #{multihead_attention.1} parent=1 // pred_check_branch
      %673 = sbr.rel (0) target = $region29
    $region28: #{multihead_attention.1} parent=1 // pred_region
      %674 = dma.done [#allocation3], 256
    $region29: #{multihead_attention.1} parent=1 // pred_fallthru
      _
    %675 = vsyncpa [#allocation3], 1

</llo_original>
